<compile_context>
chip_gen: v7x
topology: tpu7x:2x2x1
jax: 0.10.0
libtpu: 0.0.40
codegen_flags: <defaults>
</compile_context>

<pallas_src>
import functools

import jax
import jax.numpy as jnp
from jax import lax
from jax.experimental import pallas as pl
from jax.experimental.pallas import tpu as pltpu


def _supcon_kernel(x_row_ref, x_col_ref, lab_i_ref, lab_j_ref, denom_ref,
                   out_ref, pos_acc, neg_acc, *, inv_temp, tm, tn):
    """Processes one (TM, TN) tile of the N x N similarity matrix."""
    j = pl.program_id(1)

    @pl.when(j == 0)
    def _init():
        pos_acc[...] = jnp.zeros_like(pos_acc)
        neg_acc[...] = jnp.zeros_like(neg_acc)

    # Similarity tile on the MXU: (TM, D) x (TN, D)^T -> (TM, TN), f32 accum.
    sim = lax.dot_general(
        x_row_ref[...], x_col_ref[...],
        dimension_numbers=(((1,), (1,)), ((), ())),
        preferred_element_type=jnp.float32) * inv_temp

    # Label-equality mask for this tile: (TM, 1) == (1, TN) -> (TM, TN).
    eq = lab_i_ref[...] == lab_j_ref[...]

    # Per-tile diagonal mask from program_id offsets (global row == global col).
    row_ids = pl.program_id(0) * tm + lax.broadcasted_iota(jnp.int32, (tm, 1), 0)
    col_ids = j * tn + lax.broadcasted_iota(jnp.int32, (1, tn), 1)
    diag = row_ids == col_ids

    zero = jnp.zeros_like(sim)
    # positives: same label, off-diagonal.  negatives: different label.
    pos_tile = jnp.where(jnp.logical_and(eq, jnp.logical_not(diag)), sim, zero)
    # TODO(synk): no per-row max subtraction (matches the PyTorch reference);
    # add an online log-sum-exp rescale if features are not L2-normalized.
    neg_tile = jnp.where(eq, zero, jnp.exp(sim))

    pos_acc[...] += jnp.sum(pos_tile, axis=1, keepdims=True)   # (TM, 1)
    neg_acc[...] += jnp.sum(neg_tile, axis=1, keepdims=True)   # (TM, 1)

    @pl.when(j == pl.num_programs(1) - 1)
    def _finalize():
        # loss_i = -(pos_row_i / denom_i - log(neg_sum_i))
        out_ref[...] = jnp.log(neg_acc[...]) - pos_acc[...] / denom_ref[...]


def _pick_tile(n, preferred):
    """Largest of the preferred tile sizes that divides n; else full extent."""
    for t in (preferred, 512, 256, 128):
        if t <= n and n % t == 0:
            return t
    return n  # small or non-128-multiple N: one block spanning the full axis
    # TODO(synk): masked edge tiles for large N not divisible by 128.


def supcon_loss_v1(x1, x2, labels1=None, labels2=None, temperature=0.1,
                   block_rows=None, block_cols=None):
    x = jnp.concatenate([x1, x2], axis=0).astype(jnp.float32)
    n, d = x.shape

    if labels1 is not None:
        labels = jnp.concatenate([labels1, labels2]).astype(jnp.int32)
        # positives per row = (#rows with same label) - 1 (exclude self).
        # TODO(synk): replace this O(N^2) wrapper-side count with an O(N)
        # bincount when labels are dense class ids.
        denom = (jnp.sum(labels[:, None] == labels[None, :], axis=1) - 1)
        denom = denom.astype(jnp.float32)
    else:
        # torch.arange(B).repeat(2) == [0..B-1, 0..B-1]: one positive per row.
        labels = jnp.tile(jnp.arange(x1.shape[0], dtype=jnp.int32), 2)
        denom = jnp.ones((n,), jnp.float32)

    lab_col = labels.reshape(n, 1)      # labels for the row tile, (N, 1)
    lab_row = labels.reshape(1, n)      # labels for the column tile, (1, N)
    denom = denom.reshape(n, 1)

    # Tile sizes sized for the 32 MiB scoped-VMEM default (fits v5e/v6e/v7x).
    tm = block_rows if block_rows is not None else _pick_tile(n, 256)
    tn = block_cols if block_cols is not None else _pick_tile(n, 512)
    assert n % tm == 0 and n % tn == 0, (n, tm, tn)
    assert tm == n or tm % 8 == 0
    assert tn == n or tn % 128 == 0

    kernel = functools.partial(
        _supcon_kernel, inv_temp=float(1.0 / temperature), tm=tm, tn=tn)

    per_row = pl.pallas_call(
        kernel,
        out_shape=jax.ShapeDtypeStruct((n, 1), jnp.float32),
        grid_spec=pltpu.PrefetchScalarGridSpec(
            num_scalar_prefetch=0,
            grid=(n // tm, n // tn),
            in_specs=[
                pl.BlockSpec((tm, d), lambda i, j: (i, 0)),   # x row block
                pl.BlockSpec((tn, d), lambda i, j: (j, 0)),   # x col block
                pl.BlockSpec((tm, 1), lambda i, j: (i, 0)),   # row-tile labels
                pl.BlockSpec((1, tn), lambda i, j: (0, j)),   # col-tile labels
                pl.BlockSpec((tm, 1), lambda i, j: (i, 0)),   # positives/row
            ],
            out_specs=pl.BlockSpec((tm, 1), lambda i, j: (i, 0)),
            scratch_shapes=[pltpu.VMEM((tm, 1), jnp.float32),   # pos_row acc
                            pltpu.VMEM((tm, 1), jnp.float32)],  # neg_sum acc
        ),
        compiler_params=pltpu.CompilerParams(
            dimension_semantics=("parallel", "arbitrary")),
    )(x, x, lab_col, lab_row, denom)

    per_row = per_row[:, 0]
    # Mirror torch.where(isnan(loss), 0, loss): rows with zero positives (0/0).
    per_row = jnp.where(jnp.isnan(per_row), 0.0, per_row)
    return jnp.mean(per_row)


def _supcon_ref(x1, x2, labels1=None, labels2=None, temperature=0.1):
    """Pure-JAX reference mirroring the PyTorch forward exactly."""
    x = jnp.concatenate([x1, x2], axis=0)
    n = x.shape[0]
    sim = (x @ x.T) / temperature
    if labels1 is not None:
        labels = jnp.concatenate([labels1, labels2])
    else:
        labels = jnp.tile(jnp.arange(x1.shape[0]), 2)
    eq = labels[:, None] == labels[None, :]
    p_mask = eq.astype(jnp.float32) - jnp.eye(n, dtype=jnp.float32)
    n_mask = (~eq).astype(jnp.float32)
    pos_sim = sim * p_mask
    neg_sum = jnp.sum(jnp.exp(sim) * n_mask, axis=1, keepdims=True)
    loss = -(p_mask * (pos_sim - jnp.log(neg_sum)))
    loss = jnp.sum(loss, axis=1) / jnp.sum(p_mask, axis=1)
    loss = jnp.where(jnp.isnan(loss), 0.0, loss)
    return jnp.mean(loss)


if __name__ == "__main__":
    key = jax.random.PRNGKey(0)
    k1, k2 = jax.random.split(key)

    # --- check 1: default-label path, tiny shapes (single-tile fallback) ---
    B, D = 4, 32
    x1 = jax.random.normal(k1, (B, D), dtype=jnp.float32)
    x2 = jax.random.normal(k2, (B, D), dtype=jnp.float32)
    # L2-normalize so exp(sim / T) stays finite (see numerics note above).
    x1 = x1 / jnp.linalg.norm(x1, axis=1, keepdims=True)
    x2 = x2 / jnp.linalg.norm(x2, axis=1, keepdims=True)

    loss = jax.block_until_ready(supcon_loss_v1(x1, x2, temperature=0.1))
    ref = _supcon_ref(x1, x2, temperature=0.1)
    assert jnp.allclose(loss, ref, rtol=1e-4, atol=1e-4), (loss, ref)

    # --- check 2: explicit-label path, multi-tile 2x2 grid with accumulation ---
    B2, D2 = 128, 32
    k3, k4 = jax.random.split(k2)
    y1 = jax.random.normal(k3, (B2, D2), dtype=jnp.float32)
    y2 = jax.random.normal(k4, (B2, D2), dtype=jnp.float32)
    y1 = y1 / jnp.linalg.norm(y1, axis=1, keepdims=True)
    y2 = y2 / jnp.linalg.norm(y2, axis=1, keepdims=True)
    lab1 = jnp.arange(B2, dtype=jnp.int32) // 2
    lab2 = lab1.at[-1].set(999)   # singleton label -> denom 0 -> NaN -> 0 path

    loss2 = jax.block_until_ready(
        supcon_loss_v1(y1, y2, lab1, lab2, temperature=0.1,
                       block_rows=128, block_cols=128))
    ref2 = _supcon_ref(y1, y2, lab1, lab2, temperature=0.1)
    assert jnp.allclose(loss2, ref2, rtol=1e-4, atol=1e-4), (loss2, ref2)

    print("KERNEL_OK")
</pallas_src>

<mosaic_0001>
module attributes {stable_mosaic.version = 11 : i64} {
  func.func @_supcon_kernel(%arg0: i32, %arg1: i32, %arg2: memref<8x32xf32, #tpu.memory_space<vmem>>, %arg3: memref<8x32xf32, #tpu.memory_space<vmem>>, %arg4: memref<8x1xi32, #tpu.memory_space<vmem>>, %arg5: memref<1x8xi32, #tpu.memory_space<vmem>>, %arg6: memref<8x1xf32, #tpu.memory_space<vmem>>, %arg7: memref<8x1xf32, #tpu.memory_space<vmem>>, %arg8: memref<8x1xf32, #tpu.memory_space<vmem>>, %arg9: memref<8x1xf32, #tpu.memory_space<vmem>>) attributes {dimension_semantics = [#tpu.dimension_semantics<parallel>, #tpu.dimension_semantics<arbitrary>], iteration_bounds = array<i64: 1, 1>, scalar_prefetch = 0 : i64, scratch_operands = 2 : i64, tpu.core_type = #tpu.core_type<tc>, window_params = [{transform_indices = @transform_0, window_bounds = array<i64: 8, 32>}, {transform_indices = @transform_1, window_bounds = array<i64: 8, 32>}, {transform_indices = @transform_2, window_bounds = array<i64: 8, 1>}, {transform_indices = @transform_3, window_bounds = array<i64: 1, 8>}, {transform_indices = @transform_4, window_bounds = array<i64: 8, 1>}, {transform_indices = @transform_5, window_bounds = array<i64: 8, 1>}]} {
    %c0_i32 = arith.constant 0 : i32
    %0 = arith.cmpi eq, %arg1, %c0_i32 : i32
    %1 = arith.extui %0 : i1 to i32
    %c0_i32_0 = arith.constant 0 : i32
    %2 = arith.cmpi ne, %1, %c0_i32_0 : i32
    scf.if %2 {
      %cst_24 = arith.constant 0.000000e+00 : f32
      %43 = vector.broadcast %cst_24 : f32 to vector<8x1xf32>
      %c0_25 = arith.constant 0 : index
      %c0_26 = arith.constant 0 : index
      %44 = vector.load %arg8[%c0_25, %c0_26] : memref<8x1xf32, #tpu.memory_space<vmem>>, vector<8x1xf32>
      tpu.vector_store %arg8[%c0_25, %c0_26], %43 {strides = array<i32>} : memref<8x1xf32, #tpu.memory_space<vmem>>, vector<8x1xf32>,
      %cst_27 = arith.constant 0.000000e+00 : f32
      %45 = vector.broadcast %cst_27 : f32 to vector<8x1xf32>
      %c0_28 = arith.constant 0 : index
      %c0_29 = arith.constant 0 : index
      %46 = vector.load %arg9[%c0_28, %c0_29] : memref<8x1xf32, #tpu.memory_space<vmem>>, vector<8x1xf32>
      tpu.vector_store %arg9[%c0_28, %c0_29], %45 {strides = array<i32>} : memref<8x1xf32, #tpu.memory_space<vmem>>, vector<8x1xf32>,
    } else {
    }
    %c0 = arith.constant 0 : index
    %c0_1 = arith.constant 0 : index
    %3 = vector.load %arg2[%c0, %c0_1] : memref<8x32xf32, #tpu.memory_space<vmem>>, vector<8x32xf32>
    %c0_2 = arith.constant 0 : index
    %c0_3 = arith.constant 0 : index
    %4 = vector.load %arg3[%c0_2, %c0_3] : memref<8x32xf32, #tpu.memory_space<vmem>>, vector<8x32xf32>
    %cst = arith.constant dense<0.000000e+00> : vector<8x8xf32>
    %5 = tpu.matmul %3, %4, %cst {dimension_numbers = #tpu.dot_dimension_numbers<[1], [1], [0], [0], [0, 0, 1, 0], [], []>} : vector<8x32xf32>, vector<8x32xf32>, vector<8x8xf32> -> vector<8x8xf32>
    %cst_4 = arith.constant 1.000000e+01 : f32
    %6 = vector.broadcast %cst_4 : f32 to vector<8x8xf32>
    %7 = arith.mulf %5, %6 : vector<8x8xf32>
    %c0_5 = arith.constant 0 : index
    %c0_6 = arith.constant 0 : index
    %8 = vector.load %arg4[%c0_5, %c0_6] : memref<8x1xi32, #tpu.memory_space<vmem>>, vector<8x1xi32>
    %c0_7 = arith.constant 0 : index
    %c0_8 = arith.constant 0 : index
    %9 = vector.load %arg5[%c0_7, %c0_8] : memref<1x8xi32, #tpu.memory_space<vmem>>, vector<1x8xi32>
    %10 = vector.broadcast %8 : vector<8x1xi32> to vector<8x8xi32>
    %11 = vector.broadcast %9 : vector<1x8xi32> to vector<8x8xi32>
    %12 = arith.cmpi eq, %10, %11 : vector<8x8xi32>
    %c8_i32 = arith.constant 8 : i32
    %13 = arith.muli %arg0, %c8_i32 : i32
    %14 = tpu.iota {dimensions = array<i32: 0>} : vector<8x1xi32>
    %15 = vector.broadcast %13 : i32 to vector<8x1xi32>
    %16 = arith.addi %15, %14 : vector<8x1xi32>
    %c8_i32_9 = arith.constant 8 : i32
    %17 = arith.muli %arg1, %c8_i32_9 : i32
    %18 = tpu.iota {dimensions = array<i32: 1>} : vector<1x8xi32>
    %19 = vector.broadcast %17 : i32 to vector<1x8xi32>
    %20 = arith.addi %19, %18 : vector<1x8xi32>
    %21 = vector.broadcast %16 : vector<8x1xi32> to vector<8x8xi32>
    %22 = vector.broadcast %20 : vector<1x8xi32> to vector<8x8xi32>
    %23 = arith.cmpi eq, %21, %22 : vector<8x8xi32>
    %cst_10 = arith.constant 0.000000e+00 : f32
    %24 = vector.broadcast %cst_10 : f32 to vector<8x8xf32>
    %cst_11 = arith.constant dense<true> : vector<8x8xi1>
    %25 = arith.xori %23, %cst_11 : vector<8x8xi1>
    %26 = arith.andi %12, %25 : vector<8x8xi1>
    %27 = arith.select %26, %7, %24 : vector<8x8xi1>, vector<8x8xf32>
    %28 = math.exp %7 : vector<8x8xf32>
    %29 = arith.select %12, %24, %28 : vector<8x8xi1>, vector<8x8xf32>
    %c0_12 = arith.constant 0 : index
    %c0_13 = arith.constant 0 : index
    %30 = vector.load %arg8[%c0_12, %c0_13] : memref<8x1xf32, #tpu.memory_space<vmem>>, vector<8x1xf32>
    %cst_14 = arith.constant dense<0.000000e+00> : vector<8xf32>
    %31 = vector.multi_reduction <add>, %27, %cst_14 [1] : vector<8x8xf32> to vector<8xf32>
    %32 = vector.shape_cast %31 : vector<8xf32> to vector<8x1xf32>
    %33 = arith.addf %30, %32 : vector<8x1xf32>
    %c0_15 = arith.constant 0 : index
    %c0_16 = arith.constant 0 : index
    %34 = vector.load %arg8[%c0_15, %c0_16] : memref<8x1xf32, #tpu.memory_space<vmem>>, vector<8x1xf32>
    tpu.vector_store %arg8[%c0_15, %c0_16], %33 {strides = array<i32>} : memref<8x1xf32, #tpu.memory_space<vmem>>, vector<8x1xf32>,
    %c0_17 = arith.constant 0 : index
    %c0_18 = arith.constant 0 : index
    %35 = vector.load %arg9[%c0_17, %c0_18] : memref<8x1xf32, #tpu.memory_space<vmem>>, vector<8x1xf32>
    %cst_19 = arith.constant dense<0.000000e+00> : vector<8xf32>
    %36 = vector.multi_reduction <add>, %29, %cst_19 [1] : vector<8x8xf32> to vector<8xf32>
    %37 = vector.shape_cast %36 : vector<8xf32> to vector<8x1xf32>
    %38 = arith.addf %35, %37 : vector<8x1xf32>
    %c0_20 = arith.constant 0 : index
    %c0_21 = arith.constant 0 : index
    %39 = vector.load %arg9[%c0_20, %c0_21] : memref<8x1xf32, #tpu.memory_space<vmem>>, vector<8x1xf32>
    tpu.vector_store %arg9[%c0_20, %c0_21], %38 {strides = array<i32>} : memref<8x1xf32, #tpu.memory_space<vmem>>, vector<8x1xf32>,
    %c0_i32_22 = arith.constant 0 : i32
    %40 = arith.cmpi eq, %arg1, %c0_i32_22 : i32
    %41 = arith.extui %40 : i1 to i32
    %c0_i32_23 = arith.constant 0 : i32
    %42 = arith.cmpi ne, %41, %c0_i32_23 : i32
    scf.if %42 {
      %c0_24 = arith.constant 0 : index
      %c0_25 = arith.constant 0 : index
      %43 = vector.load %arg9[%c0_24, %c0_25] : memref<8x1xf32, #tpu.memory_space<vmem>>, vector<8x1xf32>
      %44 = math.log %43 : vector<8x1xf32>
      %c0_26 = arith.constant 0 : index
      %c0_27 = arith.constant 0 : index
      %45 = vector.load %arg8[%c0_26, %c0_27] : memref<8x1xf32, #tpu.memory_space<vmem>>, vector<8x1xf32>
      %c0_28 = arith.constant 0 : index
      %c0_29 = arith.constant 0 : index
      %46 = vector.load %arg6[%c0_28, %c0_29] : memref<8x1xf32, #tpu.memory_space<vmem>>, vector<8x1xf32>
      %47 = arith.divf %45, %46 : vector<8x1xf32>
      %48 = arith.subf %44, %47 : vector<8x1xf32>
      %c0_30 = arith.constant 0 : index
      %c0_31 = arith.constant 0 : index
      %49 = vector.load %arg7[%c0_30, %c0_31] : memref<8x1xf32, #tpu.memory_space<vmem>>, vector<8x1xf32>
      tpu.vector_store %arg7[%c0_30, %c0_31], %48 {strides = array<i32>} : memref<8x1xf32, #tpu.memory_space<vmem>>, vector<8x1xf32>,
    } else {
    }
    return
  }
  func.func @transform_0(%arg0: i32, %arg1: i32) -> (i32, i32) {
    %c0_i32 = arith.constant 0 : i32
    %c0_i32_0 = arith.constant 0 : i32
    return %arg0, %c0_i32 : i32, i32
  }
  func.func @transform_1(%arg0: i32, %arg1: i32) -> (i32, i32) {
    %c0_i32 = arith.constant 0 : i32
    %c0_i32_0 = arith.constant 0 : i32
    return %arg1, %c0_i32 : i32, i32
  }
  func.func @transform_2(%arg0: i32, %arg1: i32) -> (i32, i32) {
    %c0_i32 = arith.constant 0 : i32
    %c0_i32_0 = arith.constant 0 : i32
    return %arg0, %c0_i32 : i32, i32
  }
  func.func @transform_3(%arg0: i32, %arg1: i32) -> (i32, i32) {
    %c0_i32 = arith.constant 0 : i32
    %c0_i32_0 = arith.constant 0 : i32
    return %c0_i32, %arg1 : i32, i32
  }
  func.func @transform_4(%arg0: i32, %arg1: i32) -> (i32, i32) {
    %c0_i32 = arith.constant 0 : i32
    %c0_i32_0 = arith.constant 0 : i32
    return %arg0, %c0_i32 : i32, i32
  }
  func.func @transform_5(%arg0: i32, %arg1: i32) -> (i32, i32) {
    %c0_i32 = arith.constant 0 : i32
    %c0_i32_0 = arith.constant 0 : i32
    return %arg0, %c0_i32 : i32, i32
  }
}

</mosaic_0001>

<llo_original>
// kernel: tpu_custom_call.1
$region0: #{tpu_custom_call.1}
  #allocation0 [shape = 'u32[]', space=smem, size = 0x4, offset = 0x4, fixed_abs, tag = 'smem constant byte address 0x4 - core index']
  #allocation1 [shape = 'u32[144,128]{1,0:T(1,128)}', space=vmem, size = 0x12000, scoped, tag = 'internal scratch']
  #allocation2 [shape = 'f32[8,1]{1,0:T(8,128)}', space=vmem, size = 0x1000, scoped, tag = 'scratch operand']
  #allocation3 [shape = 'f32[8,1]{1,0:T(8,128)}', space=vmem, size = 0x1000, scoped, tag = 'scratch operand']
  %s0 = inlined_call_operand.vmem [shape: f32[8,32], index: 0, kind: input, shape index: {}]
  %s1 = inlined_call_operand.vmem [shape: f32[8,32], index: 1, kind: input, shape index: {}]
  %s2 = inlined_call_operand.vmem [shape: s32[8,1], index: 2, kind: input, shape index: {}]
  %s3 = inlined_call_operand.vmem [shape: s32[1,8], index: 3, kind: input, shape index: {}]
  %s4 = inlined_call_operand.vmem [shape: f32[8,1], index: 4, kind: input, shape index: {}]
  %s5 = inlined_call_operand.vmem [shape: f32[8,1], index: 5, kind: output, shape index: {}]
  %s6 = sld [smem:[#allocation0]]
  $region38: #{tpu_custom_call.1} parent=0
    _
  %s8 = ssub.s32 1, %s6
  %s9 = scalar_select 0, %s8, %s6
  // Predicated region
  $region2: #{tpu_custom_call.1} parent=0 // pred_check
    _
  $region3: #{tpu_custom_call.1} parent=0 // pred_check_branch
    %11 = sbr.rel (0) target = $region5
  $region4: #{tpu_custom_call.1} parent=0 // pred_region
    _
  $region5: #{tpu_custom_call.1} parent=0 // pred_fallthru
    _
  // Predicated region
  $region6: #{tpu_custom_call.1} parent=0 // pred_check
    _
  $region7: #{tpu_custom_call.1} parent=0 // pred_check_branch
    %13 = sbr.rel (0) target = $region9
  $region8: #{tpu_custom_call.1} parent=0 // pred_region
    _
  $region9: #{tpu_custom_call.1} parent=0 // pred_fallthru
    _
  // Predicated region
  $region10: #{tpu_custom_call.1} parent=0 // pred_check
    _
  $region11: #{tpu_custom_call.1} parent=0 // pred_check_branch
    %15 = sbr.rel (0) target = $region13
  $region12: #{tpu_custom_call.1} parent=0 // pred_region
    _
  $region13: #{tpu_custom_call.1} parent=0 // pred_fallthru
    _
  // Predicated region
  $region14: #{tpu_custom_call.1} parent=0 // pred_check
    _
  $region15: #{tpu_custom_call.1} parent=0 // pred_check_branch
    %17 = sbr.rel (0) target = $region17
  $region16: #{tpu_custom_call.1} parent=0 // pred_region
    _
  $region17: #{tpu_custom_call.1} parent=0 // pred_fallthru
    _
  // Predicated region
  $region18: #{tpu_custom_call.1} parent=0 // pred_check
    _
  $region19: #{tpu_custom_call.1} parent=0 // pred_check_branch
    %19 = sbr.rel (0) target = $region21
  $region20: #{tpu_custom_call.1} parent=0 // pred_region
    _
  $region21: #{tpu_custom_call.1} parent=0 // pred_fallthru
    _
  %p20 = scmp.eq.s32.totalorder 0, 0
  // Predicated region
  $region22: #{tpu_custom_call.1} parent=0 // pred_check
    %p21 = pneg %p20
  $region23: #{tpu_custom_call.1} parent=0 // pred_check_branch
    %23 = sbr.rel (%p21) target = $region25
  $region24: #{tpu_custom_call.1} parent=0 // pred_region
    %vm24 = vcmask 7168
    %25 = vst.msk [vmem:[#allocation2] sm:$0xff] %vm24, 0.0
    %26 = vst.msk [vmem:[#allocation3] sm:$0xff] %vm24, 0.0
  $region25: #{tpu_custom_call.1} parent=0 // pred_fallthru
    _
  %v27 = vld [vmem:[%s0] sm:$0xff]
  %v28 = vld [vmem:[%s1] sm:$0xff]
  %vm29 = vcmask 261120
  %v31 = vsel %vm29, %v27, 0
  %v34 = vsel %vm29, %v28, 0
  %36 = vmatprep.subr.mxu0 0.0
  %37 = vmatpush1.xpose.msra.mxu0 %v34
  %38 = vmatprep.subr.mxu0 0.0
  %39 = vmatpush1.xpose.msra.mxu0 0.0
  %40 = vmatprep.subr.mxu0 0.0
  %41 = vmatpush1.xpose.msra.mxu0 0.0
  %42 = vmatprep.subr.mxu0 0.0
  %43 = vmatpush1.xpose.msra.mxu0 0.0
  %44 = vmatprep.subr.mxu0 0.0
  %45 = vmatpush1.xpose.msra.mxu0 0.0
  %46 = vmatprep.subr.mxu0 0.0
  %47 = vmatpush1.xpose.msra.mxu0 0.0
  %48 = vmatprep.subr.mxu0 0.0
  %49 = vmatpush1.xpose.msra.mxu0 0.0
  %50 = vmatprep.subr.mxu0 0.0
  %51 = vmatpush1.xpose.msra.mxu0 0.0
  %52 = vmatprep.subr.mxu0 0.0
  %53 = vmatpush1.xpose.msra.mxu0 0.0
  %54 = vmatprep.subr.mxu0 0.0
  %55 = vmatpush1.xpose.msra.mxu0 0.0
  %56 = vmatprep.subr.mxu0 0.0
  %57 = vmatpush1.xpose.msra.mxu0 0.0
  %58 = vmatprep.subr.mxu0 0.0
  %59 = vmatpush1.xpose.msra.mxu0 0.0
  %60 = vmatprep.subr.mxu0 0.0
  %61 = vmatpush1.xpose.msra.mxu0 0.0
  %62 = vmatprep.subr.mxu0 0.0
  %63 = vmatpush1.xpose.msra.mxu0 0.0
  %64 = vmatprep.subr.mxu0 0.0
  %65 = vmatpush1.xpose.msra.mxu0 0.0
  %66 = vmatprep.subr.mxu0 0.0
  %67 = vmatpush1.xpose.msra.mxu0 0.0
  %68 = vmatprep.subr.mxu0 0.0
  %69 = vmatpush1.xpose.msra.mxu0 0.0
  %70 = vmatprep.subr.mxu0 0.0
  %71 = vmatpush1.xpose.msra.mxu0 0.0
  %72 = vmatprep.subr.mxu0 0.0
  %73 = vmatpush1.xpose.msra.mxu0 0.0
  %74 = vmatprep.subr.mxu0 0.0
  %75 = vmatpush1.xpose.msra.mxu0 0.0
  %76 = vmatprep.subr.mxu0 0.0
  %77 = vmatpush1.xpose.msra.mxu0 0.0
  %78 = vmatprep.subr.mxu0 0.0
  %79 = vmatpush1.xpose.msra.mxu0 0.0
  %80 = vmatprep.subr.mxu0 0.0
  %81 = vmatpush1.xpose.msra.mxu0 0.0
  %82 = vmatprep.subr.mxu0 0.0
  %83 = vmatpush1.xpose.msra.mxu0 0.0
  %84 = vmatprep.subr.mxu0 0.0
  %85 = vmatpush1.xpose.msra.mxu0 0.0
  %86 = vmatprep.subr.mxu0 0.0
  %87 = vmatpush1.xpose.msra.mxu0 0.0
  %88 = vmatprep.subr.mxu0 0.0
  %89 = vmatpush1.xpose.msra.mxu0 0.0
  %90 = vmatprep.subr.mxu0 0.0
  %91 = vmatpush1.xpose.msra.mxu0 0.0
  %92 = vmatprep.subr.mxu0 0.0
  %93 = vmatpush1.xpose.msra.mxu0 0.0
  %94 = vmatprep.subr.mxu0 0.0
  %95 = vmatpush1.xpose.msra.mxu0 0.0
  %96 = vmatprep.subr.mxu0 0.0
  %97 = vmatpush1.xpose.msra.mxu0 0.0
  %98 = vmatprep.subr.mxu0 0.0
  %99 = vmatpush1.xpose.msra.mxu0 0.0
  %100 = vmatprep.mubr.f32.mxu0 0.0
  %101 = vmatmul.mubr.f32.gmra.mrb[0].mxu0 %v31
  %v102 = vpop.f32.mrb[0].mxu0
  %v103 = vadd.f32 0.0, %v102
  %v104 = vpop.f32.mrb[0].mxu0
  %105 = vdwg.mxu0
  %v106 = vmul.f32 %v103, 10.0
  %v107 = vld [vmem:[%s2] sm:$0xff]
  %v108 = vld [vmem:[%s3] sm:$0x1]
  %109 = vset.pattern.permute.xlu0 0
  %110 = vperm.xlu0 %109, %v107
  %v111 = vpop.permute.xlu0 %110
  %v112 = vlaneseq
  %v113 = vshrl.u32 %v112, 7
  %v114 = vsub.s32 0, %v113
  %v115 = vrot.slane %v108, %v114
  %vm116 = vcmp.eq.s32.totalorder %v111, %v115
  %s117 = smul.u32 0, 8
  %v118 = vlaneseq
  %v119 = vshrl.u32 %v118, 7
  %v120 = vstv %s117
  %v121 = vadd.s32 %v120, %v119
  %s122 = smul.u32 0, 8
  %v123 = vlaneseq
  %v124 = vand.u32 %v123, 127
  %v125 = vstv %s122
  %v126 = vadd.s32 %v125, %v124
  %vm127 = vcmp.eq.s32.totalorder %v121, %v126
  %vm128 = vmxor %vm127, 1
  %vm129 = vmand %vm116, %vm128
  %v130 = vsel %vm129, %v106, 0.0
  %v131 = vmul.f32 %v106, 1.442695
  %v132 = vpow.pop %v131
  %v133 = vsel %vm116, 0.0, %v132
  %v134 = vld [vmem:[#allocation2] sm:$0xff]
  %vm135 = vcmask 64512
  %v136 = vsel %vm135, %v130, 0.0
  %137 = vadd.xlane.f32.xlu0 %v136
  %v138 = vpop.xlane.xlu0 %137
  %v139 = vadd.f32 %v134, %v138
  %vm140 = vcmask 7168
  %141 = vst.msk [vmem:[#allocation2] sm:$0xff] %vm140, %v139
  %v142 = vld [vmem:[#allocation3] sm:$0xff]
  %v143 = vsel %vm135, %v133, 0.0
  %144 = vadd.xlane.f32.xlu0 %v143
  %v145 = vpop.xlane.xlu0 %144
  %v146 = vadd.f32 %v142, %v145
  %147 = vst.msk [vmem:[#allocation3] sm:$0xff] %vm140, %v146
  // Predicated region
  $region26: #{tpu_custom_call.1} parent=0 // pred_check
    %p148 = pneg %p20
  $region27: #{tpu_custom_call.1} parent=0 // pred_check_branch
    %150 = sbr.rel (%p148) target = $region29
  $region28: #{tpu_custom_call.1} parent=0 // pred_region
    %v151 = vld [vmem:[#allocation3] sm:$0xff]
    %v152 = vlog2.pop %v151
    %v153 = vmul.f32 %v152, 0.6931472
    %v154 = vld [vmem:[#allocation2] sm:$0xff]
    %v155 = vld [vmem:[%s4] sm:$0xff]
    %v156 = vrcp.pop %v155
    %v157 = vmul.f32 %v154, %v156
    %v158 = vsub.f32 %v153, %v157
    %159 = vst.msk [vmem:[%s5] sm:$0xff] %vm140, %v158
  $region29: #{tpu_custom_call.1} parent=0 // pred_fallthru
    _
  // Predicated region
  $region30: #{tpu_custom_call.1} parent=0 // pred_check
    _
  $region31: #{tpu_custom_call.1} parent=0 // pred_check_branch
    %161 = sbr.rel (0) target = $region33
  $region32: #{tpu_custom_call.1} parent=0 // pred_region
    _
  $region33: #{tpu_custom_call.1} parent=0 // pred_fallthru
    _
  // Predicated region
  $region34: #{tpu_custom_call.1} parent=0 // pred_check
    _
  $region35: #{tpu_custom_call.1} parent=0 // pred_check_branch
    %163 = sbr.rel (0) target = $region37
  $region36: #{tpu_custom_call.1} parent=0 // pred_region
    _
  $region37: #{tpu_custom_call.1} parent=0 // pred_fallthru
    _

</llo_original>
